<compile_context>
chip_gen: v6e
topology: v6e:2x2x1
jax: 0.10.0
libtpu: 0.0.40
codegen_flags: <defaults>
</compile_context>

<pallas_src>
import functools

import jax
import jax.numpy as jnp
import numpy as np
from jax.experimental import pallas as pl
from jax.experimental.pallas import tpu as pltpu


def _round_up(x, m):
    return (x + m - 1) // m * m


def _conv_bn_relu_kernel(x_ref, w_ref, b_ref, o_ref, slab_ref, *,
                         K, W_pad, C_in, M_pad):
    """Grid = (N, C_out // tco): one batch element x one C_out tile.

    x_ref:    (1, C_in, Lp)      bf16 zero-padded, flattened input
    w_ref:    (tco, K*K*C_in)    bf16 BN-folded weight matrix (single contraction)
    b_ref:    (tco, 1)           f32 BN-folded bias
    o_ref:    (1, tco, M_pad)    f32 output, lane dim padded to a 128 multiple
    slab_ref: (K*K*C_in, M_pad)  bf16 im2col slab scratch (persists across c axis)
    """
    # Build the im2col slab only on the first C_out tile of each batch element;
    # the scratch persists across the inner ("arbitrary") C_out grid axis.
    @pl.when(pl.program_id(1) == 0)
    def _():
        for kh in range(K):
            for kw in range(K):
                t = kh * K + kw
                d = kh * W_pad + kw                      # static flat-shift offset
                slab_ref[pl.ds(t * C_in, C_in), :] = x_ref[0, :, pl.ds(d, M_pad)]

    # One fat MXU matmul: contraction over K*K*C_in instead of K*K tiny dots.
    acc = jnp.dot(w_ref[...], slab_ref[...], preferred_element_type=jnp.float32)
    acc = acc + b_ref[...]                               # (tco, 1) lane broadcast
    o_ref[0] = jnp.maximum(acc, 0.0).astype(o_ref.dtype)  # fused ReLU + dense store


def conv2d_relu_pallas(x, weight, conv_bias, bn, *, stride=1, padding=0, eps=1e-5):
    """Conv2d(KxK, stride=1, padding) + BatchNorm2d(eval) + ReLU, NCHW layout.

    x:         (N, C_in, H, W) float32
    weight:    (C_out, C_in, K, K)
    conv_bias: (C_out,) or None   (PyTorch module uses bias only when use_batchnorm=False)
    bn:        dict(gamma, beta, mean, var) each (C_out,), or None
    """
    if stride != 1:
        # TODO(synk): stride > 1 needs strided output extraction; only stride=1 implemented.
        raise NotImplementedError("stride != 1 not supported")
    N, C_in, H, W = x.shape
    C_out, C_in_w, K, K2 = weight.shape
    assert C_in_w == C_in and K == K2

    H_pad, W_pad = H + 2 * padding, W + 2 * padding
    assert W_pad >= K and H_pad >= K, "kernel larger than padded input"
    H_out, W_out = H_pad - K + 1, W_pad - K + 1
    M = H_out * W_pad                      # valid lane-dense output length
    M_pad = _round_up(M, 128)              # 128-multiple -> unmasked stores
    d_max = (K - 1) * W_pad + (K - 1)      # largest flat-shift offset
    Lp = _round_up(d_max + M_pad, 128)     # padded flattened input length

    # ---- fold BatchNorm (eval mode) + conv bias into per-channel scale/shift ----
    if bn is not None:
        inv_std = jax.lax.rsqrt(bn["var"].astype(jnp.float32) + eps)
        scale = bn["gamma"].astype(jnp.float32) * inv_std                 # (C_out,)
        shift = bn["beta"].astype(jnp.float32) - bn["mean"].astype(jnp.float32) * scale
    else:
        scale = jnp.ones((C_out,), jnp.float32)
        shift = jnp.zeros((C_out,), jnp.float32)
    if conv_bias is not None:
        shift = shift + conv_bias.astype(jnp.float32) * scale

    # Weight matrix for the single big contraction; row order matches the slab
    # build order (kh, kw, c_in).  Fed to the MXU in bf16.
    w_eff = weight.astype(jnp.float32) * scale[:, None, None, None]       # (C_out,C_in,K,K)
    w_mat = jnp.transpose(w_eff, (0, 2, 3, 1)).reshape(C_out, K * K * C_in)
    w_mat = w_mat.astype(jnp.bfloat16)
    b_col = shift.reshape(C_out, 1).astype(jnp.float32)

    # ---- zero-pad spatially, flatten, pad tail to Lp, cast to bf16 ----
    # TODO(synk): this pad and the final [:, :, :M] slice are extra HBM passes;
    # they could be folded into the kernel via a pl.ANY + manual-DMA input path.
    x_p = jnp.pad(x, ((0, 0), (0, 0), (padding, padding), (padding, padding)))
    x_flat = x_p.reshape(N, C_in, H_pad * W_pad)
    x_flat = jnp.pad(x_flat, ((0, 0), (0, 0), (0, Lp - H_pad * W_pad)))
    x_flat = x_flat.astype(jnp.bfloat16)

    # ---- C_out tiling: bound VMEM / feed the 128/256-wide MXU sensibly ----
    if C_out > 256 and C_out % 256 == 0:
        tco = 256
    elif C_out > 128 and C_out % 128 == 0:
        tco = 128
    else:
        tco = C_out
    n_co = C_out // tco
    KKC = K * K * C_in

    # Footprint-derived VMEM limit (double-buffered in/out + weights + slab + acc),
    # with headroom, capped at 48 MiB so it is safe on v7x's 64 MiB VMEM.
    footprint = (2 * C_in * Lp * 2            # x block, bf16, double-buffered
                 + 2 * tco * KKC * 2          # weight block, bf16, double-buffered
                 + 2 * tco * 4                # bias block
                 + 2 * tco * M_pad * 4        # output block, f32, double-buffered
                 + KKC * M_pad * 2            # im2col slab scratch, bf16
                 + tco * M_pad * 4)           # f32 accumulator temporaries
    vmem_limit = int(min(max(2 * footprint, 16 * 1024 * 1024), 48 * 1024 * 1024))

    cost = pl.CostEstimate(
        flops=2 * N * C_out * C_in * K * K * H_out * W_out,
        transcendentals=0,
        bytes_accessed=(x_flat.size * 2 + w_mat.size * 2 + b_col.size * 4
                        + N * C_out * M_pad * 4),
    )

    out_flat = pl.pallas_call(
        functools.partial(_conv_bn_relu_kernel, K=K, W_pad=W_pad, C_in=C_in, M_pad=M_pad),
        out_shape=jax.ShapeDtypeStruct((N, C_out, M_pad), jnp.float32),
        grid_spec=pltpu.PrefetchScalarGridSpec(
            num_scalar_prefetch=0,
            grid=(N, n_co),
            in_specs=[
                pl.BlockSpec((1, C_in, Lp), lambda n, c: (n, 0, 0)),
                pl.BlockSpec((tco, KKC), lambda n, c: (c, 0)),
                pl.BlockSpec((tco, 1), lambda n, c: (c, 0)),
            ],
            out_specs=pl.BlockSpec((1, tco, M_pad), lambda n, c: (n, c, 0)),
            scratch_shapes=[pltpu.VMEM((KKC, M_pad), jnp.bfloat16)],
        ),
        compiler_params=pltpu.CompilerParams(
            dimension_semantics=("parallel", "arbitrary"),
            vmem_limit_bytes=vmem_limit,
        ),
        cost_estimate=cost,
    )(x_flat, w_mat, b_col)

    # Valid columns: first M lanes, then the first W_out of each padded-width row.
    out = out_flat[:, :, :M].reshape(N, C_out, H_out, W_pad)[..., :W_out]
    return out


def _reference(x, weight, conv_bias, bn, *, stride=1, padding=0, eps=1e-5):
    """Pure-JAX reference of the PyTorch Conv2dReLU forward (eval-mode BN), NCHW."""
    y = jax.lax.conv_general_dilated(
        x, weight, window_strides=(stride, stride),
        padding=((padding, padding), (padding, padding)),
        dimension_numbers=("NCHW", "OIHW", "NCHW"))
    if conv_bias is not None:
        y = y + conv_bias[None, :, None, None]
    if bn is not None:
        inv_std = jax.lax.rsqrt(bn["var"] + eps)
        y = (y - bn["mean"][None, :, None, None]) \
            * (bn["gamma"] * inv_std)[None, :, None, None] \
            + bn["beta"][None, :, None, None]
    return jnp.maximum(y, 0.0)


if __name__ == "__main__":
    key = jax.random.PRNGKey(0)
    kx, kw, kg, kb, km, kv = jax.random.split(key, 6)

    # Conv2dReLU(in_channels=4, out_channels=8, kernel_size=3, padding=1,
    #            stride=1, use_batchnorm=True)
    N, C_in, H, W = 2, 4, 16, 16
    C_out, K, padding = 8, 3, 1

    x = jax.random.normal(kx, (N, C_in, H, W), jnp.float32)
    weight = jax.random.normal(kw, (C_out, C_in, K, K), jnp.float32) * 0.1
    bn = {
        "gamma": 1.0 + 0.1 * jax.random.normal(kg, (C_out,), jnp.float32),
        "beta": 0.1 * jax.random.normal(kb, (C_out,), jnp.float32),
        "mean": 0.1 * jax.random.normal(km, (C_out,), jnp.float32),
        "var": jax.random.uniform(kv, (C_out,), jnp.float32, minval=0.5, maxval=1.5),
    }
    conv_bias = None  # bias = not use_batchnorm

    out = conv2d_relu_pallas(x, weight, conv_bias, bn, stride=1, padding=padding)
    out = jax.block_until_ready(out)

    ref = _reference(x, weight, conv_bias, bn, stride=1, padding=padding)
    # bf16 MXU inputs (f32 accumulation) -> relaxed tolerance vs the f32 reference.
    np.testing.assert_allclose(np.asarray(out), np.asarray(ref),
                               rtol=2e-2, atol=2e-2)
    print("KERNEL_OK")
</pallas_src>

<mosaic_0001>
module attributes {stable_mosaic.version = 11 : i64} {
  func.func @_conv_bn_relu_kernel(%arg0: i32, %arg1: i32, %arg2: memref<1x4x512xbf16, #tpu.memory_space<vmem>>, %arg3: memref<8x36xbf16, #tpu.memory_space<vmem>>, %arg4: memref<8x1xf32, #tpu.memory_space<vmem>>, %arg5: memref<1x8x384xf32, #tpu.memory_space<vmem>>, %arg6: memref<36x384xbf16, #tpu.memory_space<vmem>>) attributes {dimension_semantics = [#tpu.dimension_semantics<parallel>, #tpu.dimension_semantics<arbitrary>], iteration_bounds = array<i64: 2, 1>, scalar_prefetch = 0 : i64, scratch_operands = 1 : i64, tpu.core_type = #tpu.core_type<tc>, window_params = [{transform_indices = @transform_0, window_bounds = array<i64: 1, 4, 512>}, {transform_indices = @transform_1, window_bounds = array<i64: 8, 36>}, {transform_indices = @transform_2, window_bounds = array<i64: 8, 1>}, {transform_indices = @transform_3, window_bounds = array<i64: 1, 8, 384>}]} {
    %c0_i32 = arith.constant 0 : i32
    %0 = arith.cmpi eq, %arg1, %c0_i32 : i32
    %1 = arith.extui %0 : i1 to i32
    %c0_i32_0 = arith.constant 0 : i32
    %2 = arith.cmpi ne, %1, %c0_i32_0 : i32
    scf.if %2 {
      %c0_10 = arith.constant 0 : index
      %c0_11 = arith.constant 0 : index
      %c0_12 = arith.constant 0 : index
      %14 = vector.load %arg2[%c0_10, %c0_11, %c0_12] : memref<1x4x512xbf16, #tpu.memory_space<vmem>>, vector<1x4x384xbf16>
      %15 = vector.shape_cast %14 : vector<1x4x384xbf16> to vector<4x384xbf16>
      %c0_13 = arith.constant 0 : index
      %c0_14 = arith.constant 0 : index
      %16 = vector.load %arg6[%c0_13, %c0_14] : memref<36x384xbf16, #tpu.memory_space<vmem>>, vector<4x384xbf16>
      tpu.vector_store %arg6[%c0_13, %c0_14], %15 {strides = array<i32>} : memref<36x384xbf16, #tpu.memory_space<vmem>>, vector<4x384xbf16>,
      %c0_15 = arith.constant 0 : index
      %c0_16 = arith.constant 0 : index
      %c1 = arith.constant 1 : index
      %17 = vector.load %arg2[%c0_15, %c0_16, %c1] : memref<1x4x512xbf16, #tpu.memory_space<vmem>>, vector<1x4x384xbf16>
      %18 = vector.shape_cast %17 : vector<1x4x384xbf16> to vector<4x384xbf16>
      %c4 = arith.constant 4 : index
      %c0_17 = arith.constant 0 : index
      %19 = vector.load %arg6[%c4, %c0_17] : memref<36x384xbf16, #tpu.memory_space<vmem>>, vector<4x384xbf16>
      tpu.vector_store %arg6[%c4, %c0_17], %18 {strides = array<i32>} : memref<36x384xbf16, #tpu.memory_space<vmem>>, vector<4x384xbf16>,
      %c0_18 = arith.constant 0 : index
      %c0_19 = arith.constant 0 : index
      %c2 = arith.constant 2 : index
      %20 = vector.load %arg2[%c0_18, %c0_19, %c2] : memref<1x4x512xbf16, #tpu.memory_space<vmem>>, vector<1x4x384xbf16>
      %21 = vector.shape_cast %20 : vector<1x4x384xbf16> to vector<4x384xbf16>
      %c8 = arith.constant 8 : index
      %c0_20 = arith.constant 0 : index
      %22 = vector.load %arg6[%c8, %c0_20] : memref<36x384xbf16, #tpu.memory_space<vmem>>, vector<4x384xbf16>
      tpu.vector_store %arg6[%c8, %c0_20], %21 {strides = array<i32>} : memref<36x384xbf16, #tpu.memory_space<vmem>>, vector<4x384xbf16>,
      %c0_21 = arith.constant 0 : index
      %c0_22 = arith.constant 0 : index
      %c18 = arith.constant 18 : index
      %23 = vector.load %arg2[%c0_21, %c0_22, %c18] : memref<1x4x512xbf16, #tpu.memory_space<vmem>>, vector<1x4x384xbf16>
      %24 = vector.shape_cast %23 : vector<1x4x384xbf16> to vector<4x384xbf16>
      %c12 = arith.constant 12 : index
      %c0_23 = arith.constant 0 : index
      %25 = vector.load %arg6[%c12, %c0_23] : memref<36x384xbf16, #tpu.memory_space<vmem>>, vector<4x384xbf16>
      tpu.vector_store %arg6[%c12, %c0_23], %24 {strides = array<i32>} : memref<36x384xbf16, #tpu.memory_space<vmem>>, vector<4x384xbf16>,
      %c0_24 = arith.constant 0 : index
      %c0_25 = arith.constant 0 : index
      %c19 = arith.constant 19 : index
      %26 = vector.load %arg2[%c0_24, %c0_25, %c19] : memref<1x4x512xbf16, #tpu.memory_space<vmem>>, vector<1x4x384xbf16>
      %27 = vector.shape_cast %26 : vector<1x4x384xbf16> to vector<4x384xbf16>
      %c16 = arith.constant 16 : index
      %c0_26 = arith.constant 0 : index
      %28 = vector.load %arg6[%c16, %c0_26] : memref<36x384xbf16, #tpu.memory_space<vmem>>, vector<4x384xbf16>
      tpu.vector_store %arg6[%c16, %c0_26], %27 {strides = array<i32>} : memref<36x384xbf16, #tpu.memory_space<vmem>>, vector<4x384xbf16>,
      %c0_27 = arith.constant 0 : index
      %c0_28 = arith.constant 0 : index
      %c20 = arith.constant 20 : index
      %29 = vector.load %arg2[%c0_27, %c0_28, %c20] : memref<1x4x512xbf16, #tpu.memory_space<vmem>>, vector<1x4x384xbf16>
      %30 = vector.shape_cast %29 : vector<1x4x384xbf16> to vector<4x384xbf16>
      %c20_29 = arith.constant 20 : index
      %c0_30 = arith.constant 0 : index
      %31 = vector.load %arg6[%c20_29, %c0_30] : memref<36x384xbf16, #tpu.memory_space<vmem>>, vector<4x384xbf16>
      tpu.vector_store %arg6[%c20_29, %c0_30], %30 {strides = array<i32>} : memref<36x384xbf16, #tpu.memory_space<vmem>>, vector<4x384xbf16>,
      %c0_31 = arith.constant 0 : index
      %c0_32 = arith.constant 0 : index
      %c36 = arith.constant 36 : index
      %32 = vector.load %arg2[%c0_31, %c0_32, %c36] : memref<1x4x512xbf16, #tpu.memory_space<vmem>>, vector<1x4x384xbf16>
      %33 = vector.shape_cast %32 : vector<1x4x384xbf16> to vector<4x384xbf16>
      %c24 = arith.constant 24 : index
      %c0_33 = arith.constant 0 : index
      %34 = vector.load %arg6[%c24, %c0_33] : memref<36x384xbf16, #tpu.memory_space<vmem>>, vector<4x384xbf16>
      tpu.vector_store %arg6[%c24, %c0_33], %33 {strides = array<i32>} : memref<36x384xbf16, #tpu.memory_space<vmem>>, vector<4x384xbf16>,
      %c0_34 = arith.constant 0 : index
      %c0_35 = arith.constant 0 : index
      %c37 = arith.constant 37 : index
      %35 = vector.load %arg2[%c0_34, %c0_35, %c37] : memref<1x4x512xbf16, #tpu.memory_space<vmem>>, vector<1x4x384xbf16>
      %36 = vector.shape_cast %35 : vector<1x4x384xbf16> to vector<4x384xbf16>
      %c28 = arith.constant 28 : index
      %c0_36 = arith.constant 0 : index
      %37 = vector.load %arg6[%c28, %c0_36] : memref<36x384xbf16, #tpu.memory_space<vmem>>, vector<4x384xbf16>
      tpu.vector_store %arg6[%c28, %c0_36], %36 {strides = array<i32>} : memref<36x384xbf16, #tpu.memory_space<vmem>>, vector<4x384xbf16>,
      %c0_37 = arith.constant 0 : index
      %c0_38 = arith.constant 0 : index
      %c38 = arith.constant 38 : index
      %38 = vector.load %arg2[%c0_37, %c0_38, %c38] : memref<1x4x512xbf16, #tpu.memory_space<vmem>>, vector<1x4x384xbf16>
      %39 = vector.shape_cast %38 : vector<1x4x384xbf16> to vector<4x384xbf16>
      %c32 = arith.constant 32 : index
      %c0_39 = arith.constant 0 : index
      %40 = vector.load %arg6[%c32, %c0_39] : memref<36x384xbf16, #tpu.memory_space<vmem>>, vector<4x384xbf16>
      tpu.vector_store %arg6[%c32, %c0_39], %39 {strides = array<i32>} : memref<36x384xbf16, #tpu.memory_space<vmem>>, vector<4x384xbf16>,
    } else {
    }
    %c0 = arith.constant 0 : index
    %c0_1 = arith.constant 0 : index
    %3 = vector.load %arg3[%c0, %c0_1] : memref<8x36xbf16, #tpu.memory_space<vmem>>, vector<8x36xbf16>
    %c0_2 = arith.constant 0 : index
    %c0_3 = arith.constant 0 : index
    %4 = vector.load %arg6[%c0_2, %c0_3] : memref<36x384xbf16, #tpu.memory_space<vmem>>, vector<36x384xbf16>
    %cst = arith.constant dense<0.000000e+00> : vector<8x384xf32>
    %5 = tpu.matmul %3, %4, %cst {dimension_numbers = #tpu.dot_dimension_numbers<[1], [0], [0], [1], [0, 0, 1, 1], [], []>} : vector<8x36xbf16>, vector<36x384xbf16>, vector<8x384xf32> -> vector<8x384xf32>
    %c0_4 = arith.constant 0 : index
    %c0_5 = arith.constant 0 : index
    %6 = vector.load %arg4[%c0_4, %c0_5] : memref<8x1xf32, #tpu.memory_space<vmem>>, vector<8x1xf32>
    %7 = vector.broadcast %6 : vector<8x1xf32> to vector<8x384xf32>
    %8 = arith.addf %5, %7 : vector<8x384xf32>
    %cst_6 = arith.constant 0.000000e+00 : f32
    %9 = vector.broadcast %cst_6 : f32 to vector<8x384xf32>
    %10 = arith.maximumf %8, %9 : vector<8x384xf32>
    %c0_7 = arith.constant 0 : index
    %c0_8 = arith.constant 0 : index
    %c0_9 = arith.constant 0 : index
    %11 = vector.load %arg5[%c0_7, %c0_8, %c0_9] : memref<1x8x384xf32, #tpu.memory_space<vmem>>, vector<1x8x384xf32>
    %12 = vector.shape_cast %11 : vector<1x8x384xf32> to vector<8x384xf32>
    %13 = vector.shape_cast %10 : vector<8x384xf32> to vector<1x8x384xf32>
    tpu.vector_store %arg5[%c0_7, %c0_8, %c0_9], %13 {strides = array<i32>} : memref<1x8x384xf32, #tpu.memory_space<vmem>>, vector<1x8x384xf32>,
    return
  }
  func.func @transform_0(%arg0: i32, %arg1: i32) -> (i32, i32, i32) {
    %c0_i32 = arith.constant 0 : i32
    %c0_i32_0 = arith.constant 0 : i32
    %c0_i32_1 = arith.constant 0 : i32
    return %arg0, %c0_i32, %c0_i32_0 : i32, i32, i32
  }
  func.func @transform_1(%arg0: i32, %arg1: i32) -> (i32, i32) {
    %c0_i32 = arith.constant 0 : i32
    %c0_i32_0 = arith.constant 0 : i32
    return %arg1, %c0_i32 : i32, i32
  }
  func.func @transform_2(%arg0: i32, %arg1: i32) -> (i32, i32) {
    %c0_i32 = arith.constant 0 : i32
    %c0_i32_0 = arith.constant 0 : i32
    return %arg1, %c0_i32 : i32, i32
  }
  func.func @transform_3(%arg0: i32, %arg1: i32) -> (i32, i32, i32) {
    %c0_i32 = arith.constant 0 : i32
    %c0_i32_0 = arith.constant 0 : i32
    return %arg0, %arg1, %c0_i32 : i32, i32, i32
  }
}

</mosaic_0001>

<llo_original>
// kernel: tpu_custom_call.1
$region0: #{tpu_custom_call.1}
  #allocation0 [shape = 'u32[]', space=smem, size = 0x4, offset = 0x4, fixed_abs, tag = 'smem constant byte address 0x4 - core index']
  #allocation1 [shape = 'u32[144,128]{1,0:T(1,128)}', space=vmem, size = 0x12000, scoped, tag = 'internal scratch']
  #allocation2 [shape = 'bf16[36,384]{1,0:T(8,128)(2,1)}', space=vmem, size = 0x7800, scoped, tag = 'scratch operand']
  %s0 = inlined_call_operand.hbm [shape: bf16[2,4,512], index: 0, kind: input, shape index: {}]
  %s1 = inlined_call_operand.vmem [shape: bf16[8,36], index: 1, kind: input, shape index: {}]
  %s2 = inlined_call_operand.vmem [shape: f32[8,1], index: 2, kind: input, shape index: {}]
  %s3 = inlined_call_operand.hbm [shape: f32[2,8,384], index: 3, kind: output, shape index: {}]
  %s4 = sld [smem:[#allocation0]]
  $region53: #{tpu_custom_call.1} parent=0
    _
  %s6 = ssub.s32 1, %s4
  %s7 = scalar_select 0, %s6, %s4
  $region1: #{tpu_custom_call.1} parent=0
    #allocation3 [shape = 'u8[8192]{0}', space=vmem, size = 0x2000, scoped, tag = 'input window, operand 0']
    #allocation4 [shape = 's32[2]{0}', space=sflag, size = 0x8, scoped, tag = 'scoped memory for tpu_custom_call.1']
    #allocation5 [shape = 's32[2]{0}', space=sflag, size = 0x8, scoped, tag = 'scoped memory for tpu_custom_call.1']
    #allocation6 [shape = 'u8[24576]{0}', space=vmem, size = 0x6000, scoped, tag = 'output window, operand 0']
    %8 = vsyncpa [#allocation4], 0
    %s9 = scalar_lea.sflag [#allocation4], 1
    %10 = vsyncpa %s9, 0
    %11 = vsyncpa [#allocation5], 0
    %s12 = scalar_lea.sflag [#allocation5], 1
    %13 = vsyncpa %s12, 0
    loop: start=0, step=1, limit=4
    $region2: #{tpu_custom_call.1} parent=1 // loop_pre_header
      _
    $region3: #{tpu_custom_call.1} parent=1 // loop_header
      %s15 = sphi 0, %s19
      %p16 = scmp.ge.s32.totalorder %s15, 4
      %s22 = sphi 0, %s34
      %s23 = sphi 0, %s30
      %s24 = sphi 0, %s22
      %s25 = sphi 0, %s23
      %s26 = sphi 0, %s24
      %s27 = sphi 0, %s25
      %s37 = sphi 0, %s39
      %s40 = sphi 0, %s37
      %s41 = sphi 0, %s40
      %s57 = sphi 0, %s41
      %s63 = sphi 0, %s65
      %s66 = sphi 0, %s63
      %s67 = sphi 0, %s66
      %s83 = sphi 0, %s67
      %s89 = sphi 0, %s91
      %s92 = sphi 0, %s89
      %s93 = sphi 0, %s92
      %s109 = sphi 0, %s93
      %s117 = sphi 0, %s119
      %s120 = sphi 0, %s117
      %s121 = sphi 0, %s120
      %s137 = sphi 0, %s121
    $region4: #{tpu_custom_call.1} parent=1 // loop_header_branch
      %18 = sbr.rel (%p16) target = $region8
    $region5: #{tpu_custom_call.1} parent=1 // loop_body
      %s20 = ssub.s32 %s15, 1
      %s21 = ssub.s32 %s15, 2
      %s28 = sadd.s32 1, %s23
      %p29 = scmp.ge.s32.totalorder %s28, 1
      %s30 = scalar_select %p29, 0, %s28
      %s31 = sadd.s32 1, %s22
      %s32 = scalar_select %p29, %s31, %s22
      %p33 = scmp.ge.s32.totalorder %s32, 2
      %s34 = scalar_select %p33, 0, %s32
      %s35 = ssub.s32 %s22, %s34
      %p36 = scmp.eq.s32.totalorder %s35, 0
      %s38 = sadd.s32 %s37, 1
      %s39 = scalar_select %p36, %s37, %s38
      %p42 = pneg %p36
      %p43 = scmp.eq.s32.totalorder %s15, 1
      %p44 = por %p42, %p43
      %p45 = scmp.ne.s32.totalorder %s37, %s40
      %p46 = scmp.eq.s32.totalorder %s15, 0
      %p47 = por %p45, %p46
      %p48 = scmp.ne.s32.totalorder %s37, %s40
      %p49 = scmp.eq.s32.totalorder %s20, 1
      %p50 = por %p48, %p49
      %p51 = scmp.ne.s32.totalorder %s40, %s41
      %p52 = scmp.eq.s32.totalorder %s20, 0
      %p53 = por %p51, %p52
      %p54 = scmp.ne.s32.totalorder %s40, %s41
      %p55 = scmp.eq.s32.totalorder %s21, 1
      %p56 = por %p54, %p55
      %p58 = scmp.ne.s32.totalorder %s41, %s57
      %p59 = scmp.eq.s32.totalorder %s21, 0
      %p60 = por %p58, %p59
      %s61 = ssub.s32 %s23, %s30
      %p62 = scmp.eq.s32.totalorder %s61, 0
      %s64 = sadd.s32 %s63, 1
      %s65 = scalar_select %p62, %s63, %s64
      %p68 = pneg %p62
      %p69 = scmp.eq.s32.totalorder %s15, 1
      %p70 = por %p68, %p69
      %p71 = scmp.ne.s32.totalorder %s63, %s66
      %p72 = scmp.eq.s32.totalorder %s15, 0
      %p73 = por %p71, %p72
      %p74 = scmp.ne.s32.totalorder %s63, %s66
      %p75 = scmp.eq.s32.totalorder %s20, 1
      %p76 = por %p74, %p75
      %p77 = scmp.ne.s32.totalorder %s66, %s67
      %p78 = scmp.eq.s32.totalorder %s20, 0
      %p79 = por %p77, %p78
      %p80 = scmp.ne.s32.totalorder %s66, %s67
      %p81 = scmp.eq.s32.totalorder %s21, 1
      %p82 = por %p80, %p81
      %p84 = scmp.ne.s32.totalorder %s67, %s83
      %p85 = scmp.eq.s32.totalorder %s21, 0
      %p86 = por %p84, %p85
      %s87 = ssub.s32 %s23, %s30
      %p88 = scmp.eq.s32.totalorder %s87, 0
      %s90 = sadd.s32 %s89, 1
      %s91 = scalar_select %p88, %s89, %s90
      %p94 = pneg %p88
      %p95 = scmp.eq.s32.totalorder %s15, 1
      %p96 = por %p94, %p95
      %p97 = scmp.ne.s32.totalorder %s89, %s92
      %p98 = scmp.eq.s32.totalorder %s15, 0
      %p99 = por %p97, %p98
      %p100 = scmp.ne.s32.totalorder %s89, %s92
      %p101 = scmp.eq.s32.totalorder %s20, 1
      %p102 = por %p100, %p101
      %p103 = scmp.ne.s32.totalorder %s92, %s93
      %p104 = scmp.eq.s32.totalorder %s20, 0
      %p105 = por %p103, %p104
      %p106 = scmp.ne.s32.totalorder %s92, %s93
      %p107 = scmp.eq.s32.totalorder %s21, 1
      %p108 = por %p106, %p107
      %p110 = scmp.ne.s32.totalorder %s93, %s109
      %p111 = scmp.eq.s32.totalorder %s21, 0
      %p112 = por %p110, %p111
      %s113 = ssub.s32 %s22, %s34
      %s114 = ssub.s32 %s23, %s30
      %s115 = sor.u32 %s113, %s114
      %p116 = scmp.eq.s32.totalorder %s115, 0
      %s118 = sadd.s32 %s117, 1
      %s119 = scalar_select %p116, %s117, %s118
      %p122 = pneg %p116
      %p123 = scmp.eq.s32.totalorder %s15, 1
      %p124 = por %p122, %p123
      %p125 = scmp.ne.s32.totalorder %s117, %s120
      %p126 = scmp.eq.s32.totalorder %s15, 0
      %p127 = por %p125, %p126
      %p128 = scmp.ne.s32.totalorder %s117, %s120
      %p129 = scmp.eq.s32.totalorder %s20, 1
      %p130 = por %p128, %p129
      %p131 = scmp.ne.s32.totalorder %s120, %s121
      %p132 = scmp.eq.s32.totalorder %s20, 0
      %p133 = por %p131, %p132
      %p134 = scmp.ne.s32.totalorder %s120, %s121
      %p135 = scmp.eq.s32.totalorder %s21, 1
      %p136 = por %p134, %p135
      %p138 = scmp.ne.s32.totalorder %s121, %s137
      %p139 = scmp.eq.s32.totalorder %s21, 0
      %p140 = por %p138, %p139
      %p141 = scmp.le.s32.totalorder 1, %s15
      %p142 = scmp.lt.s32.totalorder %s15, 3
      %p143 = pnand %p141, %p142
      %p144 = pneg %p143
      // Predicated region
      $region9: #{tpu_custom_call.1} parent=5 // pred_check
        _
      $region10: #{tpu_custom_call.1} parent=5 // pred_check_branch
        %146 = sbr.rel (%p143) target = $region12
      $region11: #{tpu_custom_call.1} parent=5 // pred_region
        %s147 = ssub.s32 %s15, 1
        // Predicated region
        $region13: #{tpu_custom_call.1} parent=11 // pred_check
          %p148 = pneg %p79
        $region14: #{tpu_custom_call.1} parent=11 // pred_check_branch
          %150 = sbr.rel (%p148) target = $region16
        $region15: #{tpu_custom_call.1} parent=11 // pred_region
          %p151 = scmp.lt.s32.totalorder %s25, 0
          %s152 = scalar_select %p151, %s25, 0
          %s153 = smul.addr %s152, 4
          %s154 = scalar_lea.vmem %s1, %s153
        $region16: #{tpu_custom_call.1} parent=11 // pred_fallthru
          _
        // Predicated region
        $region17: #{tpu_custom_call.1} parent=11 // pred_check
          %p155 = pneg %p105
        $region18: #{tpu_custom_call.1} parent=11 // pred_check_branch
          %157 = sbr.rel (%p155) target = $region20
        $region19: #{tpu_custom_call.1} parent=11 // pred_region
          %p158 = scmp.lt.s32.totalorder %s25, 0
          %s159 = scalar_select %p158, %s25, 0
          %s160 = smul.addr %s159, 8
          %s161 = scalar_lea.vmem %s2, %s160
        $region20: #{tpu_custom_call.1} parent=11 // pred_fallthru
          _
      $region12: #{tpu_custom_call.1} parent=5 // pred_fallthru
        _
      %p162 = scmp.lt.s32.totalorder %s15, 2
      // Predicated region
      $region21: #{tpu_custom_call.1} parent=5 // pred_check
        %p163 = pneg %p162
      $region22: #{tpu_custom_call.1} parent=5 // pred_check_branch
        %165 = sbr.rel (%p163) target = $region24
      $region23: #{tpu_custom_call.1} parent=5 // pred_region
        // Predicated region
        $region25: #{tpu_custom_call.1} parent=23 // pred_check
          %p166 = pneg %p47
        $region26: #{tpu_custom_call.1} parent=23 // pred_check_branch
          %168 = sbr.rel (%p166) target = $region28
        $region27: #{tpu_custom_call.1} parent=23 // pred_region
          %s169 = sand.u32 %s37, 1
          %s170 = scalar_lea.sflag [#allocation4], %s169
          %s171 = sand.u32 %s37, 1
          %s172 = smul.addr %s171, 8
          %s173 = scalar_lea.vmem [#allocation3], %s172
          %s175 = ssub.s32 128, 128
          %176 = vsyncadd %s170, %s175
          %s177 = smul.addr %s22, 4
          %s178 = smul.addr %s177, 32
          %s179 = scalar_lea.hbm %s0, %s178
          %s181 = sshll.u32 %s173, 4
          %s182 = int_to_ptr.vmem [resolvable:$true] %s181
          %184 = dma.hbm_to_vmem [thread:$0]  %s179, 128, %s182, %s170
        $region28: #{tpu_custom_call.1} parent=23 // pred_fallthru
          _
      $region24: #{tpu_custom_call.1} parent=5 // pred_fallthru
        _
      %p185 = scmp.le.s32.totalorder 1, %s15
      %p186 = scmp.lt.s32.totalorder %s15, 3
      %p187 = pnand %p185, %p186
      %p188 = pneg %p187
      // Predicated region
      $region29: #{tpu_custom_call.1} parent=5 // pred_check
        _
      $region30: #{tpu_custom_call.1} parent=5 // pred_check_branch
        %190 = sbr.rel (%p187) target = $region32
      $region31: #{tpu_custom_call.1} parent=5 // pred_region
        %s191 = ssub.s32 %s15, 1
        %s192 = sand.u32 %s40, 1
        %s193 = scalar_lea.sflag [#allocation4], %s192
        %s194 = sand.u32 %s40, 1
        %s195 = smul.addr %s194, 8
        %s196 = scalar_lea.vmem [#allocation3], %s195
        // Predicated region
        $region33: #{tpu_custom_call.1} parent=31 // pred_check
          %p197 = pneg %p53
        $region34: #{tpu_custom_call.1} parent=31 // pred_check_branch
          %199 = sbr.rel (%p197) target = $region36
        $region35: #{tpu_custom_call.1} parent=31 // pred_region
          %200 = dma.done %s193, 128
        $region36: #{tpu_custom_call.1} parent=31 // pred_fallthru
          _
        %s201 = sand.u32 %s40, 1
        %s202 = scalar_lea.sflag [#allocation4], %s201
        %s203 = sand.u32 %s40, 1
        %s204 = smul.addr %s203, 8
        %s205 = scalar_lea.vmem [#allocation3], %s204
        %p206 = pneg %p53
        %p207 = pneg %p50
        %p208 = scmp.lt.s32.totalorder %s25, 0
        %s209 = scalar_select %p208, %s25, 0
        %s210 = smul.addr %s209, 4
        %s211 = scalar_lea.vmem %s1, %s210
        %p212 = pneg %p79
        %p213 = pneg %p76
        %p214 = scmp.lt.s32.totalorder %s25, 0
        %s215 = scalar_select %p214, %s25, 0
        %s216 = smul.addr %s215, 8
        %s217 = scalar_lea.vmem %s2, %s216
        %p218 = pneg %p105
        %p219 = pneg %p102
        %p220 = pneg %p133
        %p221 = pneg %p130
        %s222 = sand.u32 %s120, 1
        %s223 = scalar_lea.sflag [#allocation5], %s222
        %s224 = sand.u32 %s120, 1
        %s225 = smul.addr %s224, 24
        %s226 = scalar_lea.vmem [#allocation6], %s225
        %p227 = scmp.lt.s32.totalorder %s25, 0
        %s228 = scalar_select %p227, %s25, 0
        %s229 = smul.addr %s228, 4
        %s230 = scalar_lea.vmem %s1, %s229
        %p231 = scmp.lt.s32.totalorder %s25, 0
        %s232 = scalar_select %p231, %s25, 0
        %s233 = smul.addr %s232, 8
        %s234 = scalar_lea.vmem %s2, %s233
        %p236 = scmp.eq.s32.totalorder %s25, 0
        // Predicated region
        $region37: #{tpu_custom_call.1} parent=31 // pred_check
          %p237 = pneg %p236
        $region38: #{tpu_custom_call.1} parent=31 // pred_check_branch
          %239 = sbr.rel (%p237) target = $region40
        $region39: #{tpu_custom_call.1} parent=31 // pred_region
          %v240 = vld [vmem:[%s196] sm:$0x3f]
          %v242 = vcombine.high %v240, %v240
          %v244 = vunpack.c.l.s4 1983009808
          %v245 = vunpack.c.0.s8 %v244
          %v246 = vlaneseq
          %v247 = vshrl.u32 %v246, 7
          %v248 = vsub.s32 %v245, %v247
          %v249 = vrot.slane %v240, %v248
          %v251 = vunpack.c.l.s4 1983009808
          %v252 = vunpack.c.0.s8 %v251
          %v253 = vlaneseq
          %v254 = vshrl.u32 %v253, 7
          %v255 = vsub.s32 %v252, %v254
          %v256 = vrot.slane %v242, %v255
          %259 = vst [vmem:[#allocation2] sm:$0x33] %v249
          %260 = vst [vmem:[#allocation2 + $0x8] sm:$0x3] %v256
          %v261 = vld [vmem:[%s196] sm:$0xff]
          %v263 = vcombine.low %v261, %v261
          %v265 = vunpack.c.l.s4 1983009808
          %v266 = vunpack.c.0.s8 %v265
          %v267 = vlaneseq
          %v268 = vshrl.u32 %v267, 7
          %v269 = vsub.s32 %v266, %v268
          %v270 = vrot.slane %v263, %v269
          %v272 = vunpack.c.l.s4 1983009808
          %v273 = vunpack.c.0.s8 %v272
          %v274 = vlaneseq
          %v275 = vshrl.u32 %v274, 7
          %v276 = vsub.s32 %v273, %v275
          %v277 = vrot.slane %v261, %v276
          %278 = vrot.lane.b32.xlu0 %v270, 127
          %v279 = vpop.permute.xlu0 %278
          %280 = vrot.lane.b32.xlu0 %v277, 127
          %v281 = vpop.permute.xlu0 %280
          %v282 = vrot.slane %v279, 4
          %v283 = vrot.slane %v281, 4
          %vm284 = vcmask 1043456
          %v285 = vsel %vm284, %v282, %v283
          %vm286 = vcmask 1039360
          %v287 = vsel %vm286, %v279, %v285
          %v288 = vsel %vm286, %v281, %v283
          %291 = vst [vmem:[#allocation2] sm:$0xcc] %v287
          %292 = vst [vmem:[#allocation2 + $0x8] sm:$0xc] %v288
          %v293 = vld [vmem:[%s196] sm:$0xff]
          %v295 = vcombine.high %v293, %v293
          %v297 = vunpack.c.l.s4 1983009808
          %v298 = vunpack.c.0.s8 %v297
          %v299 = vlaneseq
          %v300 = vshrl.u32 %v299, 7
          %v301 = vsub.s32 %v298, %v300
          %v302 = vrot.slane %v293, %v301
          %v304 = vunpack.c.l.s4 1983009808
          %v305 = vunpack.c.0.s8 %v304
          %v306 = vlaneseq
          %v307 = vshrl.u32 %v306, 7
          %v308 = vsub.s32 %v305, %v307
          %v309 = vrot.slane %v295, %v308
          %310 = vrot.lane.b32.xlu0 %v302, 126
          %v311 = vpop.permute.xlu0 %310
          %312 = vrot.lane.b32.xlu0 %v309, 126
          %v313 = vpop.permute.xlu0 %312
          %v314 = vrot.slane %v311, 4
          %v315 = vrot.slane %v313, 4
          %v316 = vsel %vm284, %v314, %v315
          %vm317 = vcmask 1031168
          %v318 = vsel %vm317, %v311, %v316
          %v319 = vsel %vm317, %v313, %v315
          %322 = vst [vmem:[#allocation2 + $0xc] sm:$0x33] %v318
          %323 = vst [vmem:[#allocation2 + $0x14] sm:$0x3] %v319
          %v324 = vld [vmem:[%s196] sm:$0xff]
          %v326 = vcombine.low %v324, %v324
          %v328 = vunpack.c.l.s4 1983009808
          %v329 = vunpack.c.0.s8 %v328
          %v330 = vlaneseq
          %v331 = vshrl.u32 %v330, 7
          %v332 = vsub.s32 %v329, %v331
          %v333 = vrot.slane %v326, %v332
          %v335 = vunpack.c.l.s4 1983009808
          %v336 = vunpack.c.0.s8 %v335
          %v337 = vlaneseq
          %v338 = vshrl.u32 %v337, 7
          %v339 = vsub.s32 %v336, %v338
          %v340 = vrot.slane %v324, %v339
          %341 = vrot.lane.b32.xlu0 %v333, 110
          %v342 = vpop.permute.xlu0 %341
          %343 = vrot.lane.b32.xlu0 %v340, 110
          %v344 = vpop.permute.xlu0 %343
          %v345 = vrot.slane %v342, 4
          %v346 = vrot.slane %v344, 4
          %v347 = vsel %vm284, %v345, %v346
          %vm348 = vcmask 900096
          %v349 = vsel %vm348, %v342, %v347
          %v350 = vsel %vm348, %v344, %v346
          %353 = vst [vmem:[#allocation2 + $0xc] sm:$0xcc] %v349
          %354 = vst [vmem:[#allocation2 + $0x14] sm:$0xc] %v350
          %v355 = vld [vmem:[%s196] sm:$0xff]
          %v357 = vcombine.high %v355, %v355
          %v359 = vunpack.c.l.s4 1983009808
          %v360 = vunpack.c.0.s8 %v359
          %v361 = vlaneseq
          %v362 = vshrl.u32 %v361, 7
          %v363 = vsub.s32 %v360, %v362
          %v364 = vrot.slane %v355, %v363
          %v366 = vunpack.c.l.s4 1983009808
          %v367 = vunpack.c.0.s8 %v366
          %v368 = vlaneseq
          %v369 = vshrl.u32 %v368, 7
          %v370 = vsub.s32 %v367, %v369
          %v371 = vrot.slane %v357, %v370
          %372 = vrot.lane.b32.xlu0 %v364, 109
          %v373 = vpop.permute.xlu0 %372
          %374 = vrot.lane.b32.xlu0 %v371, 109
          %v375 = vpop.permute.xlu0 %374
          %v376 = vrot.slane %v373, 4
          %v377 = vrot.slane %v375, 4
          %v378 = vsel %vm284, %v376, %v377
          %vm379 = vcmask 891904
          %v380 = vsel %vm379, %v373, %v378
          %v381 = vsel %vm379, %v375, %v377
          %384 = vst [vmem:[#allocation2 + $0x18] sm:$0x33] %v380
          %385 = vst [vmem:[#allocation2 + $0x20] sm:$0x3] %v381
          %v386 = vld [vmem:[%s196] sm:$0xff]
          %v388 = vcombine.low %v386, %v386
          %v390 = vunpack.c.l.s4 1983009808
          %v391 = vunpack.c.0.s8 %v390
          %v392 = vlaneseq
          %v393 = vshrl.u32 %v392, 7
          %v394 = vsub.s32 %v391, %v393
          %v395 = vrot.slane %v388, %v394
          %v397 = vunpack.c.l.s4 1983009808
          %v398 = vunpack.c.0.s8 %v397
          %v399 = vlaneseq
          %v400 = vshrl.u32 %v399, 7
          %v401 = vsub.s32 %v398, %v400
          %v402 = vrot.slane %v386, %v401
          %403 = vrot.lane.b32.xlu0 %v395, 108
          %v404 = vpop.permute.xlu0 %403
          %405 = vrot.lane.b32.xlu0 %v402, 108
          %v406 = vpop.permute.xlu0 %405
          %v407 = vrot.slane %v404, 4
          %v408 = vrot.slane %v406, 4
          %v409 = vsel %vm284, %v407, %v408
          %vm410 = vcmask 883712
          %v411 = vsel %vm410, %v404, %v409
          %v412 = vsel %vm410, %v406, %v408
          %415 = vst [vmem:[#allocation2 + $0x18] sm:$0xcc] %v411
          %416 = vst [vmem:[#allocation2 + $0x20] sm:$0xc] %v412
          %v417 = vld [vmem:[%s196] sm:$0xff]
          %v419 = vcombine.high %v417, %v417
          %v421 = vunpack.c.l.s4 1983009808
          %v422 = vunpack.c.0.s8 %v421
          %v423 = vlaneseq
          %v424 = vshrl.u32 %v423, 7
          %v425 = vsub.s32 %v422, %v424
          %v426 = vrot.slane %v417, %v425
          %v428 = vunpack.c.l.s4 1983009808
          %v429 = vunpack.c.0.s8 %v428
          %v430 = vlaneseq
          %v431 = vshrl.u32 %v430, 7
          %v432 = vsub.s32 %v429, %v431
          %v433 = vrot.slane %v419, %v432
          %434 = vrot.lane.b32.xlu0 %v426, 92
          %v435 = vpop.permute.xlu0 %434
          %436 = vrot.lane.b32.xlu0 %v433, 92
          %v437 = vpop.permute.xlu0 %436
          %v438 = vrot.slane %v435, 4
          %v439 = vrot.slane %v437, 4
          %v440 = vsel %vm284, %v438, %v439
          %vm441 = vcmask 752640
          %v442 = vsel %vm441, %v435, %v440
          %v443 = vsel %vm441, %v437, %v439
          %446 = vst [vmem:[#allocation2 + $0x24] sm:$0x33] %v442
          %447 = vst [vmem:[#allocation2 + $0x2c] sm:$0x3] %v443
          %v448 = vld [vmem:[%s196] sm:$0xff]
          %v450 = vcombine.low %v448, %v448
          %v452 = vunpack.c.l.s4 1983009808
          %v453 = vunpack.c.0.s8 %v452
          %v454 = vlaneseq
          %v455 = vshrl.u32 %v454, 7
          %v456 = vsub.s32 %v453, %v455
          %v457 = vrot.slane %v450, %v456
          %v459 = vunpack.c.l.s4 1983009808
          %v460 = vunpack.c.0.s8 %v459
          %v461 = vlaneseq
          %v462 = vshrl.u32 %v461, 7
          %v463 = vsub.s32 %v460, %v462
          %v464 = vrot.slane %v448, %v463
          %465 = vrot.lane.b32.xlu0 %v457, 91
          %v466 = vpop.permute.xlu0 %465
          %467 = vrot.lane.b32.xlu0 %v464, 91
          %v468 = vpop.permute.xlu0 %467
          %v469 = vrot.slane %v466, 4
          %v470 = vrot.slane %v468, 4
          %v471 = vsel %vm284, %v469, %v470
          %vm472 = vcmask 744448
          %v473 = vsel %vm472, %v466, %v471
          %v474 = vsel %vm472, %v468, %v470
          %477 = vst [vmem:[#allocation2 + $0x24] sm:$0xcc] %v473
          %478 = vst [vmem:[#allocation2 + $0x2c] sm:$0xc] %v474
          %v479 = vld [vmem:[%s196] sm:$0xff]
          %v481 = vcombine.high %v479, %v479
          %v483 = vunpack.c.l.s4 1983009808
          %v484 = vunpack.c.0.s8 %v483
          %v485 = vlaneseq
          %v486 = vshrl.u32 %v485, 7
          %v487 = vsub.s32 %v484, %v486
          %v488 = vrot.slane %v479, %v487
          %v490 = vunpack.c.l.s4 1983009808
          %v491 = vunpack.c.0.s8 %v490
          %v492 = vlaneseq
          %v493 = vshrl.u32 %v492, 7
          %v494 = vsub.s32 %v491, %v493
          %v495 = vrot.slane %v481, %v494
          %496 = vrot.lane.b32.xlu0 %v488, 90
          %v497 = vpop.permute.xlu0 %496
          %498 = vrot.lane.b32.xlu0 %v495, 90
          %v499 = vpop.permute.xlu0 %498
          %v500 = vrot.slane %v497, 4
          %v501 = vrot.slane %v499, 4
          %v502 = vsel %vm284, %v500, %v501
          %vm503 = vcmask 736256
          %v504 = vsel %vm503, %v497, %v502
          %v505 = vsel %vm503, %v499, %v501
          %508 = vst [vmem:[#allocation2 + $0x30] sm:$0x33] %v504
          %509 = vst [vmem:[#allocation2 + $0x38] sm:$0x3] %v505
        $region40: #{tpu_custom_call.1} parent=31 // pred_fallthru
          _
        %v510 = vld [vmem:[%s230] sm:$0xf]
        %v511 = vld [vmem:[#allocation2] sm:$0xff]
        %v512 = vld [vmem:[#allocation2 + $0x8] sm:$0xf]
        %v513 = vld [vmem:[#allocation2 + $0xc] sm:$0xff]
        %v514 = vld [vmem:[#allocation2 + $0x14] sm:$0xf]
        %v515 = vld [vmem:[#allocation2 + $0x18] sm:$0xff]
        %v516 = vld [vmem:[#allocation2 + $0x20] sm:$0xf]
        %v517 = vld [vmem:[#allocation2 + $0x24] sm:$0xff]
        %v518 = vld [vmem:[#allocation2 + $0x2c] sm:$0xf]
        %v519 = vld [vmem:[#allocation2 + $0x30] sm:$0x33]
        %v520 = vld [vmem:[#allocation2 + $0x38] sm:$0x3]
        %v521 = vld [vmem:[%s234] sm:$0xff]
        %523 = vset.pattern.permute.xlu0 0
        %524 = vperm.xlu0 %523, %v521
        %v525 = vpop.permute.xlu0 %524
        %v537 = vunpack.c.l.b16 %v511
        %v538 = vunpack.c.h.b16 %v511
        %v539 = vunpack.c.l.b16 %v512
        %v540 = vunpack.c.l.b16 %v513
        %v541 = vunpack.c.h.b16 %v513
        %v542 = vunpack.c.l.b16 %v514
        %v543 = vunpack.c.l.b16 %v515
        %v544 = vunpack.c.h.b16 %v515
        %v545 = vunpack.c.l.b16 %v516
        %v546 = vunpack.c.l.b16 %v517
        %v547 = vunpack.c.h.b16 %v517
        %v548 = vunpack.c.l.b16 %v518
        %v549 = vunpack.c.l.b16 %v519
        %v550 = vunpack.c.h.b16 %v519
        %v551 = vunpack.c.l.b16 %v520
        %v552 = vpack.c.b16 %v540, %v537
        %v553 = vpack.c.b16 %v541, %v538
        %v554 = vpack.c.b16 %v542, %v539
        %v555 = vpack.c.b16 %v546, %v543
        %v556 = vpack.c.b16 %v547, %v544
        %v557 = vpack.c.b16 %v548, %v545
        %v558 = vpack.c.b16 %v549, %v549
        %v559 = vpack.c.b16 %v550, %v550
        %v560 = vpack.c.b16 %v551, %v551
        %vm567 = vcmask 293888
        %v569 = vsel %vm567, %v510, 0
        %vm571 = vcmask 1041408
        %v573 = vsel %vm571, %v558, 0
        %v576 = vsel %vm571, %v559, 0
        %v579 = vsel %vm571, %v560, 0
        %581 = vmatprep.subr.bf16.mxu0 0
        %582 = vmatpush1.bf16.msra.mxu0 0
        %583 = vmatprep.subr.bf16.mxu0 0
        %584 = vmatpush1.bf16.msra.mxu0 0
        %585 = vmatprep.subr.bf16.mxu0 0
        %586 = vmatpush1.bf16.msra.mxu0 0
        %587 = vmatprep.subr.bf16.mxu0 0
        %588 = vmatpush1.bf16.msra.mxu0 0
        %589 = vmatprep.subr.bf16.mxu0 0
        %590 = vmatpush1.bf16.msra.mxu0 0
        %591 = vmatprep.subr.bf16.mxu0 %v576
        %592 = vmatpush1.bf16.msra.mxu0 %v573
        %593 = vmatprep.subr.bf16.mxu0 %v556
        %594 = vmatpush1.bf16.msra.mxu0 %v555
        %595 = vmatprep.subr.bf16.mxu0 %v553
        %596 = vmatpush1.bf16.msra.mxu0 %v552
        %597 = vmatprep.subr.bf16.mxu0 0
        %598 = vmatpush2.bf16.msra.mxu0 0
        %599 = vmatprep.subr.bf16.mxu0 0
        %600 = vmatpush2.bf16.msra.mxu0 0
        %601 = vmatprep.subr.bf16.mxu0 0
        %602 = vmatpush2.bf16.msra.mxu0 0
        %603 = vmatprep.subr.bf16.mxu0 0
        %604 = vmatpush2.bf16.msra.mxu0 0
        %605 = vmatprep.subr.bf16.mxu0 0
        %606 = vmatpush2.bf16.msra.mxu0 0
        %607 = vmatprep.subr.bf16.mxu0 0
        %608 = vmatpush2.bf16.msra.mxu0 0
        %609 = vmatprep.subr.bf16.mxu0 0
        %610 = vmatpush2.bf16.msra.mxu0 0
        %611 = vmatprep.subr.bf16.mxu0 0
        %612 = vmatpush2.bf16.msra.mxu0 0
        %613 = vmatprep.mubr.bf16.mxu0 0
        %614 = vmatmul.mubr.bf16.gmra.mxu0 %v569
        %v615 = vpop.f32.mrf.mxu0
        %v616 = vadd.f32 %v525, %v615
        %v617 = vpop.f32.mrf.mxu0
        %v618 = vadd.f32 %v525, %v617
        %v619 = vpop.f32.mrf.mxu0
        %v620 = vpop.f32.mrf.mxu0
        %621 = vdwg.mxu0
        %622 = vmatprep.subr.bf16.mxu0 0
        %623 = vmatpush1.bf16.msra.mxu0 0
        %624 = vmatprep.subr.bf16.mxu0 0
        %625 = vmatpush1.bf16.msra.mxu0 0
        %626 = vmatprep.subr.bf16.mxu0 0
        %627 = vmatpush1.bf16.msra.mxu0 0
        %628 = vmatprep.subr.bf16.mxu0 0
        %629 = vmatpush1.bf16.msra.mxu0 0
        %630 = vmatprep.subr.bf16.mxu0 0
        %631 = vmatpush1.bf16.msra.mxu0 0
        %632 = vmatprep.subr.bf16.mxu0 0
        %633 = vmatpush1.bf16.msra.mxu0 %v579
        %634 = vmatprep.subr.bf16.mxu0 0
        %635 = vmatpush1.bf16.msra.mxu0 %v557
        %636 = vmatprep.subr.bf16.mxu0 0
        %637 = vmatpush1.bf16.msra.mxu0 %v554
        %638 = vmatprep.subr.bf16.mxu0 0
        %639 = vmatpush2.bf16.msra.mxu0 0
        %640 = vmatprep.subr.bf16.mxu0 0
        %641 = vmatpush2.bf16.msra.mxu0 0
        %642 = vmatprep.subr.bf16.mxu0 0
        %643 = vmatpush2.bf16.msra.mxu0 0
        %644 = vmatprep.subr.bf16.mxu0 0
        %645 = vmatpush2.bf16.msra.mxu0 0
        %646 = vmatprep.subr.bf16.mxu0 0
        %647 = vmatpush2.bf16.msra.mxu0 0
        %648 = vmatprep.subr.bf16.mxu0 0
        %649 = vmatpush2.bf16.msra.mxu0 0
        %650 = vmatprep.subr.bf16.mxu0 0
        %651 = vmatpush2.bf16.msra.mxu0 0
        %652 = vmatprep.subr.bf16.mxu0 0
        %653 = vmatpush2.bf16.msra.mxu0 0
        %654 = vmatprep.mubr.bf16.mxu0 0
        %655 = vmatmul.mubr.bf16.gmra.mxu0 %v569
        %v656 = vpop.f32.mrf.mxu0
        %v657 = vadd.f32 %v525, %v656
        %v658 = vpop.f32.mrf.mxu0
        %v659 = vpop.f32.mrf.mxu0
        %v660 = vpop.f32.mrf.mxu0
        %661 = vdwg.mxu0
        %v662 = vmax.f32 %v616, 0.0
        %v663 = vmax.f32 %v618, 0.0
        %v664 = vmax.f32 %v657, 0.0
        %665 = vst [vmem:[%s226] sm:$0xff] %v662
        %666 = vst [vmem:[%s226 + $0x8] sm:$0xff] %v663
        %667 = vst [vmem:[%s226 + $0x10] sm:$0xff] %v664
        %s668 = sand.u32 %s120, 1
        %s669 = scalar_lea.sflag [#allocation5], %s668
        %s670 = sand.u32 %s120, 1
        %s671 = smul.addr %s670, 24
        %s672 = scalar_lea.vmem [#allocation6], %s671
        // Predicated region
        $region41: #{tpu_custom_call.1} parent=31 // pred_check
          %p673 = pneg %p130
        $region42: #{tpu_custom_call.1} parent=31 // pred_check_branch
          %675 = sbr.rel (%p673) target = $region44
        $region43: #{tpu_custom_call.1} parent=31 // pred_region
          %s677 = ssub.s32 384, 384
          %678 = vsyncadd %s669, %s677
          %s679 = smul.addr %s25, 3
          %s680 = smul.addr %s24, 3
          %s681 = sadd.s32 %s679, %s680
          %s682 = smul.addr %s681, 128
          %s683 = scalar_lea.hbm %s3, %s682
          %s685 = sshll.u32 %s672, 4
          %s686 = int_to_ptr.vmem [resolvable:$true] %s685
          %688 = dma.vmem_to_hbm [thread:$0]  %s686, 384, %s683, %s669
        $region44: #{tpu_custom_call.1} parent=31 // pred_fallthru
          _
      $region32: #{tpu_custom_call.1} parent=5 // pred_fallthru
        _
      %p689 = scmp.le.s32.totalorder 2, %s15
      // Predicated region
      $region45: #{tpu_custom_call.1} parent=5 // pred_check
        %p690 = pneg %p689
      $region46: #{tpu_custom_call.1} parent=5 // pred_check_branch
        %692 = sbr.rel (%p690) target = $region48
      $region47: #{tpu_custom_call.1} parent=5 // pred_region
        %s693 = ssub.s32 %s15, 2
        // Predicated region
        $region49: #{tpu_custom_call.1} parent=47 // pred_check
          %p694 = pneg %p136
        $region50: #{tpu_custom_call.1} parent=47 // pred_check_branch
          %696 = sbr.rel (%p694) target = $region52
        $region51: #{tpu_custom_call.1} parent=47 // pred_region
          %s697 = sand.u32 %s121, 1
          %s698 = scalar_lea.sflag [#allocation5], %s697
          %s699 = sand.u32 %s121, 1
          %s700 = smul.addr %s699, 24
          %s701 = scalar_lea.vmem [#allocation6], %s700
          %702 = dma.done %s698, 384
        $region52: #{tpu_custom_call.1} parent=47 // pred_fallthru
          _
      $region48: #{tpu_custom_call.1} parent=5 // pred_fallthru
        _
    $region6: #{tpu_custom_call.1} parent=1 // loop_footer
      %s19 = sadd.s32 1, %s15
    $region7: #{tpu_custom_call.1} parent=1 // loop_footer_branch
      %14 = sbr.rel target = $region3
    $region8: #{tpu_custom_call.1} parent=1 // loop_exit
      _
    %703 = vsyncpa [#allocation4], 1
    %s704 = scalar_lea.sflag [#allocation4], 1
    %705 = vsyncpa %s704, 1
    %706 = vsyncpa [#allocation5], 1
    %s707 = scalar_lea.sflag [#allocation5], 1
    %708 = vsyncpa %s707, 1

</llo_original>
